<compile_context>
chip_gen: v5e
topology: v5e:2x2
jax: 0.10.0
libtpu: 0.0.40
codegen_flags: <defaults>
</compile_context>

<pallas_src>
import functools

import jax
import jax.numpy as jnp
from jax import lax
from jax.experimental import pallas as pl
from jax.experimental.pallas import tpu as pltpu

input_size = 10
hidden1_size = 5
hidden2_size = 3
output_size = 1
batch_size = 1

SUBLANE = 8
CHUNK = 128          # in-kernel batch chunk: (CHUNK, 10) is CHUNK/8 vregs -> fits vreg file
MAX_TILE_B = 4096    # per-grid-step batch tile (review: 2048-8192; v5e wants >=4096)


def _round_up(n, m):
    return ((n + m - 1) // m) * m


def _cdiv(a, b):
    return -(-a // b)


H1_P = _round_up(hidden1_size, SUBLANE)   # 8
H2_P = _round_up(hidden2_size, SUBLANE)   # 8
OUT_P = _round_up(output_size, SUBLANE)   # 8


def simplenet_kernel(x_ref, w1t_ref, b1_ref, w2t_ref, b2_ref, w3_ref, b3_ref, o_ref):
    # Tiny loop-invariant operands: hoisted once per grid step.
    w1t = w1t_ref[...]   # (input_size, H1_P)
    w2t = w2t_ref[...]   # (H1_P, H2_P)
    w3 = w3_ref[...]     # (OUT_P, H2_P)   (PyTorch orientation, padded)
    b1 = b1_ref[...]     # (1, H1_P)
    b2 = b2_ref[...]     # (1, H2_P)
    b3 = b3_ref[...]     # (OUT_P, 1)

    tile_b = x_ref.shape[0]
    trans_b = (((1,), (1,)), ((), ()))   # contract minor dims (q @ k.T pattern)

    # Process the batch tile in 128-row chunks so each chunk's activations stay
    # in vregs (no spill/refill traffic on the vld/vst slots).  Static unroll.
    for c in range(tile_b // CHUNK):
        xc = x_ref[pl.ds(c * CHUNK, CHUNK), :]                       # (CHUNK, 10)
        h1 = jnp.dot(xc, w1t, preferred_element_type=jnp.float32) + b1   # (CHUNK, H1_P)
        h1 = jnp.maximum(h1, 0.0)
        h2 = jnp.dot(h1, w2t, preferred_element_type=jnp.float32) + b2   # (CHUNK, H2_P)
        h2 = jnp.maximum(h2, 0.0)
        # Last layer flips to (features, batch) so the store is lane-dense.
        o = lax.dot_general(w3, h2, trans_b,
                            preferred_element_type=jnp.float32) + b3     # (OUT_P, CHUNK)
        o_ref[:, pl.ds(c * CHUNK, CHUNK)] = o.astype(o_ref.dtype)


def prepare_params(params):
    """Pad/transpose the tiny weights ONCE, off the hot path (review #3)."""
    w1, b1, w2, b2, w3, b3 = params

    def pad2(a, rows, cols):
        return jnp.zeros((rows, cols), jnp.float32).at[: a.shape[0], : a.shape[1]].set(a)

    w1t = pad2(w1, H1_P, input_size).T                                   # (10, H1_P)
    w2t = pad2(w2, H2_P, H1_P).T                                         # (H1_P, H2_P)
    w3p = pad2(w3, OUT_P, H2_P)                                          # (OUT_P, H2_P)
    b1r = jnp.zeros((1, H1_P), jnp.float32).at[0, :hidden1_size].set(b1)
    b2r = jnp.zeros((1, H2_P), jnp.float32).at[0, :hidden2_size].set(b2)
    b3c = jnp.zeros((OUT_P, 1), jnp.float32).at[:output_size, 0].set(b3)
    return w1t, b1r, w2t, b2r, w3p, b3c


def _pick_tile_b(B):
    """Static tile choice: big tiles to amortize per-step overhead, but keep
    >=2 grid steps whenever the batch allows it so v7x's two TCs are fed."""
    b_pad = _round_up(max(B, 1), CHUNK)
    n_steps = _cdiv(b_pad, MAX_TILE_B)
    if b_pad >= 2 * CHUNK:
        n_steps = max(n_steps, 2)
    return _round_up(_cdiv(b_pad, n_steps), CHUNK)


@functools.partial(jax.jit, static_argnames=("tile_b",))
def _forward(x, prepared, tile_b):
    w1t, b1r, w2t, b2r, w3p, b3c = prepared
    B = x.shape[0]
    B_P = _round_up(max(B, tile_b), tile_b)
    x = x.astype(jnp.float32)
    if B_P != B:
        x = jnp.pad(x, ((0, B_P - B), (0, 0)))   # zero rows, discarded after the kernel

    resident = pl.BlockSpec(memory_space=pltpu.MemorySpace.VMEM)  # weights loaded once

    out_p = pl.pallas_call(
        simplenet_kernel,
        out_shape=jax.ShapeDtypeStruct((OUT_P, B_P), jnp.float32),
        grid=(B_P // tile_b,),
        in_specs=[
            # Natural-layout activation stream: contiguous HBM reads, 10 = full minor dim.
            pl.BlockSpec((tile_b, input_size), lambda i: (i, 0)),
            resident, resident,     # w1t, b1
            resident, resident,     # w2t, b2
            resident, resident,     # w3,  b3
        ],
        out_specs=pl.BlockSpec((OUT_P, tile_b), lambda i: (0, i)),   # lane-dense output
        compiler_params=pltpu.CompilerParams(dimension_semantics=("parallel",)),
    )(x, w1t, b1r, w2t, b2r, w3p, b3c)

    # TODO(synk): if the consumer can take (output_size, B) directly, fuse this
    # strip/transpose into it instead of materializing (B, 1).
    return out_p[:output_size, :B].T


def simplenet_forward(x, prepared_params):
    return _forward(x, prepared_params, _pick_tile_b(x.shape[0]))


def init_params(key):
    # Deterministic init mimicking nn.Linear's uniform(-1/sqrt(fan_in), +1/sqrt(fan_in)),
    # stored in PyTorch layout: weight (out, in), bias (out,).
    ks = jax.random.split(key, 6)

    def linear(kw, kb, fan_in, fan_out):
        bound = 1.0 / jnp.sqrt(float(fan_in))
        w = jax.random.uniform(kw, (fan_out, fan_in), jnp.float32, -bound, bound)
        b = jax.random.uniform(kb, (fan_out,), jnp.float32, -bound, bound)
        return w, b

    w1, b1 = linear(ks[0], ks[1], input_size, hidden1_size)
    w2, b2 = linear(ks[2], ks[3], hidden1_size, hidden2_size)
    w3, b3 = linear(ks[4], ks[5], hidden2_size, output_size)
    return w1, b1, w2, b2, w3, b3


def reference_forward(x, params):
    w1, b1, w2, b2, w3, b3 = params
    h1 = jnp.maximum(x @ w1.T + b1, 0.0)
    h2 = jnp.maximum(h1 @ w2.T + b2, 0.0)
    return h2 @ w3.T + b3


if __name__ == "__main__":
    key = jax.random.PRNGKey(0)
    k_x, k_xb, k_xl, k_p = jax.random.split(key, 4)

    params = init_params(k_p)
    prepared = prepare_params(params)   # padded once, off the hot path

    # Module-spec shape: batch_size = 1.
    x = jax.random.normal(k_x, (batch_size, input_size), dtype=jnp.float32)
    out = jax.block_until_ready(simplenet_forward(x, prepared))
    ref = reference_forward(x, params)
    assert out.shape == (batch_size, output_size)
    assert jnp.allclose(out, ref, atol=1e-5, rtol=1e-5), (out, ref)

    # Multi-step "parallel" grid path: 2 grid steps of 128 rows.
    xb = jax.random.normal(k_xb, (256, input_size), dtype=jnp.float32)
    outb = jax.block_until_ready(simplenet_forward(xb, prepared))
    assert outb.shape == (256, output_size)
    assert jnp.allclose(outb, reference_forward(xb, params), atol=1e-5, rtol=1e-5)

    # Large-batch path: tile_b = 4096 (2 grid steps x 32 in-kernel chunks).
    xl = jax.random.normal(k_xl, (8192, input_size), dtype=jnp.float32)
    outl = jax.block_until_ready(simplenet_forward(xl, prepared))
    assert outl.shape == (8192, output_size)
    assert jnp.allclose(outl, reference_forward(xl, params), atol=1e-4, rtol=1e-4)

    print("KERNEL_OK")
</pallas_src>

<mosaic_0001>
module attributes {stable_mosaic.version = 11 : i64} {
  func.func @simplenet_kernel(%arg0: i32, %arg1: memref<128x10xf32, #tpu.memory_space<vmem>>, %arg2: memref<10x8xf32, #tpu.memory_space<vmem>>, %arg3: memref<1x8xf32, #tpu.memory_space<vmem>>, %arg4: memref<8x8xf32, #tpu.memory_space<vmem>>, %arg5: memref<1x8xf32, #tpu.memory_space<vmem>>, %arg6: memref<8x8xf32, #tpu.memory_space<vmem>>, %arg7: memref<8x1xf32, #tpu.memory_space<vmem>>, %arg8: memref<8x128xf32, #tpu.memory_space<vmem>>) attributes {dimension_semantics = [#tpu.dimension_semantics<parallel>], iteration_bounds = array<i64: 1>, scalar_prefetch = 0 : i64, scratch_operands = 0 : i64, tpu.core_type = #tpu.core_type<tc>, window_params = [{transform_indices = @transform_0, window_bounds = array<i64: 128, 10>}, {pipeline_mode = #tpu.pipeline_mode<synchronous>, transform_indices = @transform_1, window_bounds = array<i64: 10, 8>}, {pipeline_mode = #tpu.pipeline_mode<synchronous>, transform_indices = @transform_2, window_bounds = array<i64: 1, 8>}, {pipeline_mode = #tpu.pipeline_mode<synchronous>, transform_indices = @transform_3, window_bounds = array<i64: 8, 8>}, {pipeline_mode = #tpu.pipeline_mode<synchronous>, transform_indices = @transform_4, window_bounds = array<i64: 1, 8>}, {pipeline_mode = #tpu.pipeline_mode<synchronous>, transform_indices = @transform_5, window_bounds = array<i64: 8, 8>}, {pipeline_mode = #tpu.pipeline_mode<synchronous>, transform_indices = @transform_6, window_bounds = array<i64: 8, 1>}, {transform_indices = @transform_7, window_bounds = array<i64: 8, 128>}]} {
    %c0 = arith.constant 0 : index
    %c0_0 = arith.constant 0 : index
    %0 = vector.load %arg2[%c0, %c0_0] : memref<10x8xf32, #tpu.memory_space<vmem>>, vector<10x8xf32>
    %c0_1 = arith.constant 0 : index
    %c0_2 = arith.constant 0 : index
    %1 = vector.load %arg4[%c0_1, %c0_2] : memref<8x8xf32, #tpu.memory_space<vmem>>, vector<8x8xf32>
    %c0_3 = arith.constant 0 : index
    %c0_4 = arith.constant 0 : index
    %2 = vector.load %arg6[%c0_3, %c0_4] : memref<8x8xf32, #tpu.memory_space<vmem>>, vector<8x8xf32>
    %c0_5 = arith.constant 0 : index
    %c0_6 = arith.constant 0 : index
    %3 = vector.load %arg3[%c0_5, %c0_6] : memref<1x8xf32, #tpu.memory_space<vmem>>, vector<1x8xf32>
    %c0_7 = arith.constant 0 : index
    %c0_8 = arith.constant 0 : index
    %4 = vector.load %arg5[%c0_7, %c0_8] : memref<1x8xf32, #tpu.memory_space<vmem>>, vector<1x8xf32>
    %c0_9 = arith.constant 0 : index
    %c0_10 = arith.constant 0 : index
    %5 = vector.load %arg7[%c0_9, %c0_10] : memref<8x1xf32, #tpu.memory_space<vmem>>, vector<8x1xf32>
    %c0_11 = arith.constant 0 : index
    %c0_12 = arith.constant 0 : index
    %6 = vector.load %arg1[%c0_11, %c0_12] : memref<128x10xf32, #tpu.memory_space<vmem>>, vector<128x10xf32>
    %cst = arith.constant dense<0.000000e+00> : vector<128x8xf32>
    %7 = tpu.matmul %6, %0, %cst {dimension_numbers = #tpu.dot_dimension_numbers<[1], [0], [0], [1], [0, 0, 1, 1], [], []>} : vector<128x10xf32>, vector<10x8xf32>, vector<128x8xf32> -> vector<128x8xf32>
    %8 = vector.broadcast %3 : vector<1x8xf32> to vector<128x8xf32>
    %9 = arith.addf %7, %8 : vector<128x8xf32>
    %cst_13 = arith.constant 0.000000e+00 : f32
    %10 = vector.broadcast %cst_13 : f32 to vector<128x8xf32>
    %11 = arith.maximumf %9, %10 : vector<128x8xf32>
    %cst_14 = arith.constant dense<0.000000e+00> : vector<128x8xf32>
    %12 = tpu.matmul %11, %1, %cst_14 {dimension_numbers = #tpu.dot_dimension_numbers<[1], [0], [0], [1], [0, 0, 1, 1], [], []>} : vector<128x8xf32>, vector<8x8xf32>, vector<128x8xf32> -> vector<128x8xf32>
    %13 = vector.broadcast %4 : vector<1x8xf32> to vector<128x8xf32>
    %14 = arith.addf %12, %13 : vector<128x8xf32>
    %cst_15 = arith.constant 0.000000e+00 : f32
    %15 = vector.broadcast %cst_15 : f32 to vector<128x8xf32>
    %16 = arith.maximumf %14, %15 : vector<128x8xf32>
    %cst_16 = arith.constant dense<0.000000e+00> : vector<8x128xf32>
    %17 = tpu.matmul %2, %16, %cst_16 {dimension_numbers = #tpu.dot_dimension_numbers<[1], [1], [0], [0], [0, 0, 1, 0], [], []>} : vector<8x8xf32>, vector<128x8xf32>, vector<8x128xf32> -> vector<8x128xf32>
    %18 = vector.broadcast %5 : vector<8x1xf32> to vector<8x128xf32>
    %19 = arith.addf %17, %18 : vector<8x128xf32>
    %c0_17 = arith.constant 0 : index
    %c0_18 = arith.constant 0 : index
    %20 = vector.load %arg8[%c0_17, %c0_18] : memref<8x128xf32, #tpu.memory_space<vmem>>, vector<8x128xf32>
    tpu.vector_store %arg8[%c0_17, %c0_18], %19 {strides = array<i32>} : memref<8x128xf32, #tpu.memory_space<vmem>>, vector<8x128xf32>,
    return
  }
  func.func @transform_0(%arg0: i32) -> (i32, i32) {
    %c0_i32 = arith.constant 0 : i32
    %c0_i32_0 = arith.constant 0 : i32
    return %arg0, %c0_i32 : i32, i32
  }
  func.func @transform_1(%arg0: i32) -> (i32, i32) {
    %c0_i32 = arith.constant 0 : i32
    %c0_i32_0 = arith.constant 0 : i32
    %c0_i32_1 = arith.constant 0 : i32
    return %c0_i32, %c0_i32_0 : i32, i32
  }
  func.func @transform_2(%arg0: i32) -> (i32, i32) {
    %c0_i32 = arith.constant 0 : i32
    %c0_i32_0 = arith.constant 0 : i32
    %c0_i32_1 = arith.constant 0 : i32
    return %c0_i32, %c0_i32_0 : i32, i32
  }
  func.func @transform_3(%arg0: i32) -> (i32, i32) {
    %c0_i32 = arith.constant 0 : i32
    %c0_i32_0 = arith.constant 0 : i32
    %c0_i32_1 = arith.constant 0 : i32
    return %c0_i32, %c0_i32_0 : i32, i32
  }
  func.func @transform_4(%arg0: i32) -> (i32, i32) {
    %c0_i32 = arith.constant 0 : i32
    %c0_i32_0 = arith.constant 0 : i32
    %c0_i32_1 = arith.constant 0 : i32
    return %c0_i32, %c0_i32_0 : i32, i32
  }
  func.func @transform_5(%arg0: i32) -> (i32, i32) {
    %c0_i32 = arith.constant 0 : i32
    %c0_i32_0 = arith.constant 0 : i32
    %c0_i32_1 = arith.constant 0 : i32
    return %c0_i32, %c0_i32_0 : i32, i32
  }
  func.func @transform_6(%arg0: i32) -> (i32, i32) {
    %c0_i32 = arith.constant 0 : i32
    %c0_i32_0 = arith.constant 0 : i32
    %c0_i32_1 = arith.constant 0 : i32
    return %c0_i32, %c0_i32_0 : i32, i32
  }
  func.func @transform_7(%arg0: i32) -> (i32, i32) {
    %c0_i32 = arith.constant 0 : i32
    %c0_i32_0 = arith.constant 0 : i32
    return %c0_i32, %arg0 : i32, i32
  }
}

</mosaic_0001>

<llo_original>
// kernel: _forward.1
$region0: #{_forward.1}
  #allocation0 [shape = 'u32[]', space=smem, size = 0x4, offset = 0x4, fixed_abs, tag = 'smem constant byte address 0x4 - core index']
  #allocation1 [shape = 'u32[72,128]{1,0:T(1,128)}', space=vmem, size = 0x9000, scoped, tag = 'internal scratch']
  %s0 = inlined_call_operand.vmem [shape: f32[128,10], index: 0, kind: input, shape index: {}]
  %s1 = inlined_call_operand.vmem [shape: f32[10,8], index: 1, kind: input, shape index: {}]
  %s2 = inlined_call_operand.vmem [shape: f32[1,8], index: 2, kind: input, shape index: {}]
  %s3 = inlined_call_operand.vmem [shape: f32[8,8], index: 3, kind: input, shape index: {}]
  %s4 = inlined_call_operand.vmem [shape: f32[1,8], index: 4, kind: input, shape index: {}]
  %s5 = inlined_call_operand.vmem [shape: f32[8,8], index: 5, kind: input, shape index: {}]
  %s6 = inlined_call_operand.vmem [shape: f32[8,1], index: 6, kind: input, shape index: {}]
  %s7 = inlined_call_operand.vmem [shape: f32[8,128], index: 7, kind: output, shape index: {}]
  %s8 = sld [smem:[#allocation0]]
  $region38: #{_forward.1} parent=0
    _
  %s10 = ssub.s32 1, %s8
  %s11 = scalar_select 0, %s10, %s8
  // Predicated region
  $region2: #{_forward.1} parent=0 // pred_check
    _
  $region3: #{_forward.1} parent=0 // pred_check_branch
    %13 = sbr.rel (0) target = $region5
  $region4: #{_forward.1} parent=0 // pred_region
    _
  $region5: #{_forward.1} parent=0 // pred_fallthru
    _
  // Predicated region
  $region6: #{_forward.1} parent=0 // pred_check
    _
  $region7: #{_forward.1} parent=0 // pred_check_branch
    %15 = sbr.rel (0) target = $region9
  $region8: #{_forward.1} parent=0 // pred_region
    _
  $region9: #{_forward.1} parent=0 // pred_fallthru
    _
  // Predicated region
  $region10: #{_forward.1} parent=0 // pred_check
    _
  $region11: #{_forward.1} parent=0 // pred_check_branch
    %17 = sbr.rel (0) target = $region13
  $region12: #{_forward.1} parent=0 // pred_region
    _
  $region13: #{_forward.1} parent=0 // pred_fallthru
    _
  // Predicated region
  $region14: #{_forward.1} parent=0 // pred_check
    _
  $region15: #{_forward.1} parent=0 // pred_check_branch
    %19 = sbr.rel (0) target = $region17
  $region16: #{_forward.1} parent=0 // pred_region
    _
  $region17: #{_forward.1} parent=0 // pred_fallthru
    _
  // Predicated region
  $region18: #{_forward.1} parent=0 // pred_check
    _
  $region19: #{_forward.1} parent=0 // pred_check_branch
    %21 = sbr.rel (0) target = $region21
  $region20: #{_forward.1} parent=0 // pred_region
    _
  $region21: #{_forward.1} parent=0 // pred_fallthru
    _
  // Predicated region
  $region22: #{_forward.1} parent=0 // pred_check
    _
  $region23: #{_forward.1} parent=0 // pred_check_branch
    %23 = sbr.rel (0) target = $region25
  $region24: #{_forward.1} parent=0 // pred_region
    _
  $region25: #{_forward.1} parent=0 // pred_fallthru
    _
  // Predicated region
  $region26: #{_forward.1} parent=0 // pred_check
    _
  $region27: #{_forward.1} parent=0 // pred_check_branch
    %25 = sbr.rel (0) target = $region29
  $region28: #{_forward.1} parent=0 // pred_region
    _
  $region29: #{_forward.1} parent=0 // pred_fallthru
    _
  %v26 = vld [vmem:[%s1] sm:$0xff]
  %v27 = vld [vmem:[%s1 + $0x8] sm:$0x3]
  %v28 = vld [vmem:[%s3] sm:$0xff]
  %v29 = vld [vmem:[%s5] sm:$0xff]
  %v30 = vld [vmem:[%s2] sm:$0x1]
  %v31 = vld [vmem:[%s4] sm:$0x1]
  %v32 = vld [vmem:[%s6] sm:$0xff]
  %v33 = vld [vmem:[%s0] sm:$0xff]
  %v34 = vld [vmem:[%s0 + $0x8] sm:$0xff]
  %v35 = vld [vmem:[%s0 + $0x10] sm:$0xff]
  %v36 = vld [vmem:[%s0 + $0x18] sm:$0xff]
  %v37 = vld [vmem:[%s0 + $0x20] sm:$0xff]
  %v38 = vld [vmem:[%s0 + $0x28] sm:$0xff]
  %v39 = vld [vmem:[%s0 + $0x30] sm:$0xff]
  %v40 = vld [vmem:[%s0 + $0x38] sm:$0xff]
  %v41 = vld [vmem:[%s0 + $0x40] sm:$0xff]
  %v42 = vld [vmem:[%s0 + $0x48] sm:$0xff]
  %v43 = vld [vmem:[%s0 + $0x50] sm:$0xff]
  %v44 = vld [vmem:[%s0 + $0x58] sm:$0xff]
  %v45 = vld [vmem:[%s0 + $0x60] sm:$0xff]
  %v46 = vld [vmem:[%s0 + $0x68] sm:$0xff]
  %v47 = vld [vmem:[%s0 + $0x70] sm:$0xff]
  %v48 = vld [vmem:[%s0 + $0x78] sm:$0xff]
  %v50 = vperm.slane %v30, 0
  %vm52 = vcmask 80896
  %v54 = vsel %vm52, %v33, 0
  %v57 = vsel %vm52, %v34, 0
  %v60 = vsel %vm52, %v35, 0
  %v63 = vsel %vm52, %v36, 0
  %v66 = vsel %vm52, %v37, 0
  %v69 = vsel %vm52, %v38, 0
  %v72 = vsel %vm52, %v39, 0
  %v75 = vsel %vm52, %v40, 0
  %v78 = vsel %vm52, %v41, 0
  %v81 = vsel %vm52, %v42, 0
  %v84 = vsel %vm52, %v43, 0
  %v87 = vsel %vm52, %v44, 0
  %v90 = vsel %vm52, %v45, 0
  %v93 = vsel %vm52, %v46, 0
  %v96 = vsel %vm52, %v47, 0
  %v99 = vsel %vm52, %v48, 0
  %vm101 = vcmask 1041408
  %v103 = vsel %vm101, %v27, 0
  %105 = vmatpush.msra.mxu0 0.0
  %106 = vmatpush.msra.mxu0 0.0
  %107 = vmatpush.msra.mxu0 0.0
  %108 = vmatpush.msra.mxu0 0.0
  %109 = vmatpush.msra.mxu0 0.0
  %110 = vmatpush.msra.mxu0 0.0
  %111 = vmatpush.msra.mxu0 0.0
  %112 = vmatpush.msra.mxu0 0.0
  %113 = vmatpush.msra.mxu0 0.0
  %114 = vmatpush.msra.mxu0 0.0
  %115 = vmatpush.msra.mxu0 0.0
  %116 = vmatpush.msra.mxu0 0.0
  %117 = vmatpush.msra.mxu0 0.0
  %118 = vmatpush.msra.mxu0 0.0
  %119 = vmatpush.msra.mxu0 %v103
  %120 = vmatpush.msra.mxu0 %v26
  %121 = vmatmul.f32.gmra.mxu0 %v54
  %v122 = vpop.f32.mrf.mxu0
  %v123 = vadd.f32 %v50, %v122
  %124 = vmatmul.f32.gmra.mxu0 %v57
  %v125 = vpop.f32.mrf.mxu0
  %v126 = vadd.f32 %v50, %v125
  %127 = vmatmul.f32.gmra.mxu0 %v60
  %v128 = vpop.f32.mrf.mxu0
  %v129 = vadd.f32 %v50, %v128
  %130 = vmatmul.f32.gmra.mxu0 %v63
  %v131 = vpop.f32.mrf.mxu0
  %v132 = vadd.f32 %v50, %v131
  %133 = vmatmul.f32.gmra.mxu0 %v66
  %v134 = vpop.f32.mrf.mxu0
  %v135 = vadd.f32 %v50, %v134
  %136 = vmatmul.f32.gmra.mxu0 %v69
  %v137 = vpop.f32.mrf.mxu0
  %v138 = vadd.f32 %v50, %v137
  %139 = vmatmul.f32.gmra.mxu0 %v72
  %v140 = vpop.f32.mrf.mxu0
  %v141 = vadd.f32 %v50, %v140
  %142 = vmatmul.f32.gmra.mxu0 %v75
  %v143 = vpop.f32.mrf.mxu0
  %v144 = vadd.f32 %v50, %v143
  %145 = vmatmul.f32.gmra.mxu0 %v78
  %v146 = vpop.f32.mrf.mxu0
  %v147 = vadd.f32 %v50, %v146
  %148 = vmatmul.f32.gmra.mxu0 %v81
  %v149 = vpop.f32.mrf.mxu0
  %v150 = vadd.f32 %v50, %v149
  %151 = vmatmul.f32.gmra.mxu0 %v84
  %v152 = vpop.f32.mrf.mxu0
  %v153 = vadd.f32 %v50, %v152
  %154 = vmatmul.f32.gmra.mxu0 %v87
  %v155 = vpop.f32.mrf.mxu0
  %v156 = vadd.f32 %v50, %v155
  %157 = vmatmul.f32.gmra.mxu0 %v90
  %v158 = vpop.f32.mrf.mxu0
  %v159 = vadd.f32 %v50, %v158
  %160 = vmatmul.f32.gmra.mxu0 %v93
  %v161 = vpop.f32.mrf.mxu0
  %v162 = vadd.f32 %v50, %v161
  %163 = vmatmul.f32.gmra.mxu0 %v96
  %v164 = vpop.f32.mrf.mxu0
  %v165 = vadd.f32 %v50, %v164
  %166 = vmatmul.f32.gmra.mxu0 %v99
  %v167 = vpop.f32.mrf.mxu0
  %v168 = vadd.f32 %v50, %v167
  %169 = vdwg.mxu0
  %v170 = vmax.f32 %v123, 0.0
  %v171 = vmax.f32 %v126, 0.0
  %v172 = vmax.f32 %v129, 0.0
  %v173 = vmax.f32 %v132, 0.0
  %v174 = vmax.f32 %v135, 0.0
  %v175 = vmax.f32 %v138, 0.0
  %v176 = vmax.f32 %v141, 0.0
  %v177 = vmax.f32 %v144, 0.0
  %v178 = vmax.f32 %v147, 0.0
  %v179 = vmax.f32 %v150, 0.0
  %v180 = vmax.f32 %v153, 0.0
  %v181 = vmax.f32 %v156, 0.0
  %v182 = vmax.f32 %v159, 0.0
  %v183 = vmax.f32 %v162, 0.0
  %v184 = vmax.f32 %v165, 0.0
  %v185 = vmax.f32 %v168, 0.0
  %v187 = vperm.slane %v31, 0
  %vm189 = vcmask 64512
  %v191 = vsel %vm189, %v170, 0
  %v194 = vsel %vm189, %v171, 0
  %v197 = vsel %vm189, %v172, 0
  %v200 = vsel %vm189, %v173, 0
  %v203 = vsel %vm189, %v174, 0
  %v206 = vsel %vm189, %v175, 0
  %v209 = vsel %vm189, %v176, 0
  %v212 = vsel %vm189, %v177, 0
  %v215 = vsel %vm189, %v178, 0
  %v218 = vsel %vm189, %v179, 0
  %v221 = vsel %vm189, %v180, 0
  %v224 = vsel %vm189, %v181, 0
  %v227 = vsel %vm189, %v182, 0
  %v230 = vsel %vm189, %v183, 0
  %v233 = vsel %vm189, %v184, 0
  %v236 = vsel %vm189, %v185, 0
  %238 = vmatpush.msra.mxu0 0.0
  %239 = vmatpush.msra.mxu0 0.0
  %240 = vmatpush.msra.mxu0 0.0
  %241 = vmatpush.msra.mxu0 0.0
  %242 = vmatpush.msra.mxu0 0.0
  %243 = vmatpush.msra.mxu0 0.0
  %244 = vmatpush.msra.mxu0 0.0
  %245 = vmatpush.msra.mxu0 0.0
  %246 = vmatpush.msra.mxu0 0.0
  %247 = vmatpush.msra.mxu0 0.0
  %248 = vmatpush.msra.mxu0 0.0
  %249 = vmatpush.msra.mxu0 0.0
  %250 = vmatpush.msra.mxu0 0.0
  %251 = vmatpush.msra.mxu0 0.0
  %252 = vmatpush.msra.mxu0 0.0
  %253 = vmatpush.msra.mxu0 %v28
  %254 = vmatmul.f32.gmra.mxu0 %v191
  %v255 = vpop.f32.mrf.mxu0
  %v256 = vadd.f32 %v187, %v255
  %257 = vmatmul.f32.gmra.mxu0 %v194
  %v258 = vpop.f32.mrf.mxu0
  %v259 = vadd.f32 %v187, %v258
  %260 = vmatmul.f32.gmra.mxu0 %v197
  %v261 = vpop.f32.mrf.mxu0
  %v262 = vadd.f32 %v187, %v261
  %263 = vmatmul.f32.gmra.mxu0 %v200
  %v264 = vpop.f32.mrf.mxu0
  %v265 = vadd.f32 %v187, %v264
  %266 = vmatmul.f32.gmra.mxu0 %v203
  %v267 = vpop.f32.mrf.mxu0
  %v268 = vadd.f32 %v187, %v267
  %269 = vmatmul.f32.gmra.mxu0 %v206
  %v270 = vpop.f32.mrf.mxu0
  %v271 = vadd.f32 %v187, %v270
  %272 = vmatmul.f32.gmra.mxu0 %v209
  %v273 = vpop.f32.mrf.mxu0
  %v274 = vadd.f32 %v187, %v273
  %275 = vmatmul.f32.gmra.mxu0 %v212
  %v276 = vpop.f32.mrf.mxu0
  %v277 = vadd.f32 %v187, %v276
  %278 = vmatmul.f32.gmra.mxu0 %v215
  %v279 = vpop.f32.mrf.mxu0
  %v280 = vadd.f32 %v187, %v279
  %281 = vmatmul.f32.gmra.mxu0 %v218
  %v282 = vpop.f32.mrf.mxu0
  %v283 = vadd.f32 %v187, %v282
  %284 = vmatmul.f32.gmra.mxu0 %v221
  %v285 = vpop.f32.mrf.mxu0
  %v286 = vadd.f32 %v187, %v285
  %287 = vmatmul.f32.gmra.mxu0 %v224
  %v288 = vpop.f32.mrf.mxu0
  %v289 = vadd.f32 %v187, %v288
  %290 = vmatmul.f32.gmra.mxu0 %v227
  %v291 = vpop.f32.mrf.mxu0
  %v292 = vadd.f32 %v187, %v291
  %293 = vmatmul.f32.gmra.mxu0 %v230
  %v294 = vpop.f32.mrf.mxu0
  %v295 = vadd.f32 %v187, %v294
  %296 = vmatmul.f32.gmra.mxu0 %v233
  %v297 = vpop.f32.mrf.mxu0
  %v298 = vadd.f32 %v187, %v297
  %299 = vmatmul.f32.gmra.mxu0 %v236
  %v300 = vpop.f32.mrf.mxu0
  %v301 = vadd.f32 %v187, %v300
  %302 = vdwg.mxu0
  %v303 = vmax.f32 %v256, 0.0
  %v304 = vmax.f32 %v259, 0.0
  %v305 = vmax.f32 %v262, 0.0
  %v306 = vmax.f32 %v265, 0.0
  %v307 = vmax.f32 %v268, 0.0
  %v308 = vmax.f32 %v271, 0.0
  %v309 = vmax.f32 %v274, 0.0
  %v310 = vmax.f32 %v277, 0.0
  %v311 = vmax.f32 %v280, 0.0
  %v312 = vmax.f32 %v283, 0.0
  %v313 = vmax.f32 %v286, 0.0
  %v314 = vmax.f32 %v289, 0.0
  %v315 = vmax.f32 %v292, 0.0
  %v316 = vmax.f32 %v295, 0.0
  %v317 = vmax.f32 %v298, 0.0
  %v318 = vmax.f32 %v301, 0.0
  %320 = vset.pattern.permute.xlu0 0
  %321 = vperm.xlu0 %320, %v32
  %v322 = vpop.permute.xlu0 %321
  %v325 = vsel %vm189, %v29, 0
  %v328 = vsel %vm189, %v303, 0
  %v331 = vsel %vm189, %v304, 0
  %v334 = vsel %vm189, %v305, 0
  %v337 = vsel %vm189, %v306, 0
  %v340 = vsel %vm189, %v307, 0
  %v343 = vsel %vm189, %v308, 0
  %v346 = vsel %vm189, %v309, 0
  %v349 = vsel %vm189, %v310, 0
  %v352 = vsel %vm189, %v311, 0
  %v355 = vsel %vm189, %v312, 0
  %v358 = vsel %vm189, %v313, 0
  %v361 = vsel %vm189, %v314, 0
  %v364 = vsel %vm189, %v315, 0
  %v367 = vsel %vm189, %v316, 0
  %v370 = vsel %vm189, %v317, 0
  %v373 = vsel %vm189, %v318, 0
  %375 = vmatpush.xpose.msra.mxu0 %v373
  %376 = vmatpush.xpose.msra.mxu0 %v370
  %377 = vmatpush.xpose.msra.mxu0 %v367
  %378 = vmatpush.xpose.msra.mxu0 %v364
  %379 = vmatpush.xpose.msra.mxu0 %v361
  %380 = vmatpush.xpose.msra.mxu0 %v358
  %381 = vmatpush.xpose.msra.mxu0 %v355
  %382 = vmatpush.xpose.msra.mxu0 %v352
  %383 = vmatpush.xpose.msra.mxu0 %v349
  %384 = vmatpush.xpose.msra.mxu0 %v346
  %385 = vmatpush.xpose.msra.mxu0 %v343
  %386 = vmatpush.xpose.msra.mxu0 %v340
  %387 = vmatpush.xpose.msra.mxu0 %v337
  %388 = vmatpush.xpose.msra.mxu0 %v334
  %389 = vmatpush.xpose.msra.mxu0 %v331
  %390 = vmatpush.xpose.msra.mxu0 %v328
  %391 = vmatmul.f32.gmra.mxu0 %v325
  %v392 = vpop.f32.mrf.mxu0
  %v393 = vadd.f32 %v322, %v392
  %394 = vdwg.mxu0
  %395 = vst [vmem:[%s7] sm:$0xff] %v393
  // Predicated region
  $region30: #{_forward.1} parent=0 // pred_check
    _
  $region31: #{_forward.1} parent=0 // pred_check_branch
    %397 = sbr.rel (0) target = $region33
  $region32: #{_forward.1} parent=0 // pred_region
    _
  $region33: #{_forward.1} parent=0 // pred_fallthru
    _
  // Predicated region
  $region34: #{_forward.1} parent=0 // pred_check
    _
  $region35: #{_forward.1} parent=0 // pred_check_branch
    %399 = sbr.rel (0) target = $region37
  $region36: #{_forward.1} parent=0 // pred_region
    _
  $region37: #{_forward.1} parent=0 // pred_fallthru
    _

</llo_original>
